<compile_context>
chip_gen: v7x
topology: tpu7x:2x2x1
jax: 0.10.0
libtpu: 0.0.40
codegen_flags: <defaults>
</compile_context>

<pallas_src>
import jax
import jax.numpy as jnp
from jax.experimental import pallas as pl
from jax.experimental.pallas import tpu as pltpu


def _round_up(x, m):
    return ((x + m - 1) // m) * m


def _shifted_softplus(raw):
    # softplus(raw), beta=1. Single exp + log1p (stable, no overflow branch).
    return jnp.maximum(raw, 0.0) + jnp.log1p(jnp.exp(-jnp.abs(raw)))


# ---- main kernels: DMA delivers the mu / pre-std halves separately ---------

def _gib_split_reparam_kernel(mu_in_ref, raw_in_ref, eps_ref,
                              mu_ref, std_ref, enc_ref):
    mu = mu_in_ref[...]
    std = _shifted_softplus(raw_in_ref[...] - 5.0)
    mu_ref[...] = mu
    std_ref[...] = std
    enc_ref[...] = mu + eps_ref[...] * std


def _gib_split_kernel(mu_in_ref, raw_in_ref, mu_ref, std_ref):
    mu_ref[...] = mu_in_ref[...]
    std_ref[...] = _shifted_softplus(raw_in_ref[...] - 5.0)


# ---- fallback kernels (out_channels not a multiple of 128): full-row block --

def _gib_fullrow_reparam_kernel(x_ref, eps_ref, mu_ref, std_ref, enc_ref):
    C = mu_ref.shape[-1]
    x = x_ref[...]
    mu = x[:, :C]
    std = _shifted_softplus(x[:, C:2 * C] - 5.0)
    mu_ref[...] = mu
    std_ref[...] = std
    enc_ref[...] = mu + eps_ref[...] * std


def _gib_fullrow_kernel(x_ref, mu_ref, std_ref):
    C = mu_ref.shape[-1]
    x = x_ref[...]
    mu_ref[...] = x[:, :C]
    std_ref[...] = _shifted_softplus(x[:, C:2 * C] - 5.0)


def gib_forward(encoded_output, eps, out_channels, reparam=True, tile_n=None):
    """Pallas implementation of GIB.forward (num_sample=1).

    encoded_output: (N, >=2*out_channels) float32
    eps:            (N, out_channels) standard-normal noise (only if reparam)
    returns ((mu, std), encoding) exactly like the PyTorch module.
    """
    N, twoC = encoded_output.shape
    C = out_channels
    assert twoC >= 2 * C, "encoded_output must have at least 2*out_channels columns"
    dt = encoded_output.dtype
    if reparam:
        assert eps is not None and eps.shape == (N, C), "eps must be (N, out_channels)"

    split = (C % 128 == 0)  # lane-aligned column blocks possible

    # ---- row-tile sizing: multiple of 8, VMEM-budgeted so the double-buffered
    # working set fits every generation's scoped default (v5e 16 MiB, v6e/v7x 32 MiB).
    if tile_n is None:
        itemsize = jnp.dtype(dt).itemsize
        in_cols = (2 * C) if split else twoC
        cols = in_cols + (C if reparam else 0) + (3 * C if reparam else 2 * C)
        budget = 8 * 1024 * 1024                    # conservative VMEM budget
        tile_n = budget // (2 * cols * itemsize)    # x2 for double-buffering
        tile_n = max(8, min(1024, (tile_n // 8) * 8))
    else:
        tile_n = max(8, _round_up(tile_n, 8))
    tile_n = min(tile_n, _round_up(N, 8))

    n_pad = _round_up(N, tile_n)
    if n_pad != N:
        encoded_output = jnp.pad(encoded_output, ((0, n_pad - N), (0, 0)))
        if reparam:
            eps = jnp.pad(eps, ((0, n_pad - N), (0, 0)))

    grid = (n_pad // tile_n,)

    if split:
        in_specs = [
            pl.BlockSpec((tile_n, C), lambda i: (i, 0)),  # mu half: cols [0, C)
            pl.BlockSpec((tile_n, C), lambda i: (i, 1)),  # pre-std half: cols [C, 2C)
        ]
        inputs = [encoded_output, encoded_output]
        kernel = _gib_split_reparam_kernel if reparam else _gib_split_kernel
    else:
        in_specs = [pl.BlockSpec((tile_n, twoC), lambda i: (i, 0))]
        inputs = [encoded_output]
        kernel = _gib_fullrow_reparam_kernel if reparam else _gib_fullrow_kernel

    if reparam:
        in_specs.append(pl.BlockSpec((tile_n, C), lambda i: (i, 0)))
        inputs.append(eps)

    n_out = 3 if reparam else 2
    out_shape = tuple(jax.ShapeDtypeStruct((n_pad, C), dt) for _ in range(n_out))
    out_specs = tuple(pl.BlockSpec((tile_n, C), lambda i: (i, 0))
                      for _ in range(n_out))

    outs = pl.pallas_call(
        kernel,
        out_shape=out_shape,
        grid=grid,
        in_specs=in_specs,
        out_specs=out_specs,
        compiler_params=pltpu.CompilerParams(
            dimension_semantics=("parallel",)),   # megacore sharding on v7x
    )(*inputs)

    if reparam:
        mu, std, encoding = outs
    else:
        mu, std = outs
        encoding = mu

    if n_pad != N:
        mu, std, encoding = mu[:N], std[:N], encoding[:N]

    # TODO(synk): num_sample > 1 path (expand mu/std to (n, N, C) with n noise
    # draws) is a trivial leading-axis broadcast in the wrapper; not needed for
    # the default forward.
    return (mu, std), encoding


def _reference(encoded_output, eps, out_channels):
    C = out_channels
    mu = encoded_output[:, :C]
    std = jax.nn.softplus(encoded_output[:, C:2 * C] - 5.0)
    return mu, std, mu + eps * std


if __name__ == "__main__":
    key = jax.random.PRNGKey(0)
    k_x, k_eps, k_x2, k_eps2, k_x3, k_eps3 = jax.random.split(key, 6)

    # --- main demo: 8 "nodes", out_channels=128 (hidden_dim = 256) ----------
    N, C = 8, 128
    x = jax.random.normal(k_x, (N, 2 * C), dtype=jnp.float32)
    eps = jax.random.normal(k_eps, (N, C), dtype=jnp.float32)

    (mu, std), enc = gib_forward(x, eps, C, reparam=True)
    jax.block_until_ready((mu, std, enc))
    mu_r, std_r, enc_r = _reference(x, eps, C)
    assert jnp.allclose(mu, mu_r, atol=1e-6), "mu mismatch"
    assert jnp.allclose(std, std_r, atol=1e-6), "std mismatch"
    assert jnp.allclose(enc, enc_r, atol=1e-6), "encoding mismatch"

    # --- reparam=False path (no eps stream, no encoding write) --------------
    (mu0, std0), enc0 = gib_forward(x, None, C, reparam=False)
    jax.block_until_ready((mu0, std0, enc0))
    assert jnp.allclose(mu0, mu_r, atol=1e-6), "mu mismatch (no-reparam)"
    assert jnp.allclose(std0, std_r, atol=1e-6), "std mismatch (no-reparam)"
    assert jnp.allclose(enc0, mu_r, atol=1e-6), "encoding mismatch (no-reparam)"

    # --- multi-tile + row-padding path (N not a multiple of the tile) -------
    N2, C2 = 100, 128
    x2 = jax.random.normal(k_x2, (N2, 2 * C2), dtype=jnp.float32)
    eps2 = jax.random.normal(k_eps2, (N2, C2), dtype=jnp.float32)
    (mu2, std2), enc2 = gib_forward(x2, eps2, C2, reparam=True, tile_n=32)
    jax.block_until_ready((mu2, std2, enc2))
    mu2_r, std2_r, enc2_r = _reference(x2, eps2, C2)
    assert jnp.allclose(mu2, mu2_r, atol=1e-6), "mu mismatch (tiled)"
    assert jnp.allclose(std2, std2_r, atol=1e-6), "std mismatch (tiled)"
    assert jnp.allclose(enc2, enc2_r, atol=1e-6), "encoding mismatch (tiled)"

    # --- fallback path (out_channels not a multiple of 128) -----------------
    N3, C3 = 16, 64
    x3 = jax.random.normal(k_x3, (N3, 2 * C3), dtype=jnp.float32)
    eps3 = jax.random.normal(k_eps3, (N3, C3), dtype=jnp.float32)
    (mu3, std3), enc3 = gib_forward(x3, eps3, C3, reparam=True)
    jax.block_until_ready((mu3, std3, enc3))
    mu3_r, std3_r, enc3_r = _reference(x3, eps3, C3)
    assert jnp.allclose(mu3, mu3_r, atol=1e-6), "mu mismatch (fallback)"
    assert jnp.allclose(std3, std3_r, atol=1e-6), "std mismatch (fallback)"
    assert jnp.allclose(enc3, enc3_r, atol=1e-6), "encoding mismatch (fallback)"

    print("KERNEL_OK")
</pallas_src>

<mosaic_0001>
module attributes {stable_mosaic.version = 11 : i64} {
  func.func @_gib_split_reparam_kernel(%arg0: i32, %arg1: memref<8x128xf32, #tpu.memory_space<vmem>>, %arg2: memref<8x128xf32, #tpu.memory_space<vmem>>, %arg3: memref<8x128xf32, #tpu.memory_space<vmem>>, %arg4: memref<8x128xf32, #tpu.memory_space<vmem>>, %arg5: memref<8x128xf32, #tpu.memory_space<vmem>>, %arg6: memref<8x128xf32, #tpu.memory_space<vmem>>) attributes {dimension_semantics = [#tpu.dimension_semantics<parallel>], iteration_bounds = array<i64: 1>, scalar_prefetch = 0 : i64, scratch_operands = 0 : i64, tpu.core_type = #tpu.core_type<tc>, window_params = [{transform_indices = @transform_0, window_bounds = array<i64: 8, 128>}, {transform_indices = @transform_1, window_bounds = array<i64: 8, 128>}, {transform_indices = @transform_2, window_bounds = array<i64: 8, 128>}, {transform_indices = @transform_3, window_bounds = array<i64: 8, 128>}, {transform_indices = @transform_4, window_bounds = array<i64: 8, 128>}, {transform_indices = @transform_5, window_bounds = array<i64: 8, 128>}]} {
    %c0 = arith.constant 0 : index
    %c0_0 = arith.constant 0 : index
    %0 = vector.load %arg1[%c0, %c0_0] : memref<8x128xf32, #tpu.memory_space<vmem>>, vector<8x128xf32>
    %c0_1 = arith.constant 0 : index
    %c0_2 = arith.constant 0 : index
    %1 = vector.load %arg2[%c0_1, %c0_2] : memref<8x128xf32, #tpu.memory_space<vmem>>, vector<8x128xf32>
    %cst = arith.constant 5.000000e+00 : f32
    %2 = vector.broadcast %cst : f32 to vector<8x128xf32>
    %3 = arith.subf %1, %2 : vector<8x128xf32>
    %cst_3 = arith.constant 0.000000e+00 : f32
    %4 = vector.broadcast %cst_3 : f32 to vector<8x128xf32>
    %5 = arith.maximumf %3, %4 : vector<8x128xf32>
    %6 = math.absf %3 : vector<8x128xf32>
    %cst_4 = arith.constant 0.000000e+00 : f32
    %7 = vector.broadcast %cst_4 : f32 to vector<8x128xf32>
    %8 = arith.subf %7, %6 : vector<8x128xf32>
    %9 = math.exp %8 : vector<8x128xf32>
    %10 = math.log1p %9 : vector<8x128xf32>
    %11 = arith.addf %5, %10 : vector<8x128xf32>
    %c0_5 = arith.constant 0 : index
    %c0_6 = arith.constant 0 : index
    %12 = vector.load %arg4[%c0_5, %c0_6] : memref<8x128xf32, #tpu.memory_space<vmem>>, vector<8x128xf32>
    tpu.vector_store %arg4[%c0_5, %c0_6], %0 {strides = array<i32>} : memref<8x128xf32, #tpu.memory_space<vmem>>, vector<8x128xf32>,
    %c0_7 = arith.constant 0 : index
    %c0_8 = arith.constant 0 : index
    %13 = vector.load %arg5[%c0_7, %c0_8] : memref<8x128xf32, #tpu.memory_space<vmem>>, vector<8x128xf32>
    tpu.vector_store %arg5[%c0_7, %c0_8], %11 {strides = array<i32>} : memref<8x128xf32, #tpu.memory_space<vmem>>, vector<8x128xf32>,
    %c0_9 = arith.constant 0 : index
    %c0_10 = arith.constant 0 : index
    %14 = vector.load %arg3[%c0_9, %c0_10] : memref<8x128xf32, #tpu.memory_space<vmem>>, vector<8x128xf32>
    %15 = arith.mulf %14, %11 : vector<8x128xf32>
    %16 = arith.addf %0, %15 : vector<8x128xf32>
    %c0_11 = arith.constant 0 : index
    %c0_12 = arith.constant 0 : index
    %17 = vector.load %arg6[%c0_11, %c0_12] : memref<8x128xf32, #tpu.memory_space<vmem>>, vector<8x128xf32>
    tpu.vector_store %arg6[%c0_11, %c0_12], %16 {strides = array<i32>} : memref<8x128xf32, #tpu.memory_space<vmem>>, vector<8x128xf32>,
    return
  }
  func.func @transform_0(%arg0: i32) -> (i32, i32) {
    %c0_i32 = arith.constant 0 : i32
    %c0_i32_0 = arith.constant 0 : i32
    return %arg0, %c0_i32 : i32, i32
  }
  func.func @transform_1(%arg0: i32) -> (i32, i32) {
    %c1_i32 = arith.constant 1 : i32
    %c0_i32 = arith.constant 0 : i32
    return %arg0, %c1_i32 : i32, i32
  }
  func.func @transform_2(%arg0: i32) -> (i32, i32) {
    %c0_i32 = arith.constant 0 : i32
    %c0_i32_0 = arith.constant 0 : i32
    return %arg0, %c0_i32 : i32, i32
  }
  func.func @transform_3(%arg0: i32) -> (i32, i32) {
    %c0_i32 = arith.constant 0 : i32
    %c0_i32_0 = arith.constant 0 : i32
    return %arg0, %c0_i32 : i32, i32
  }
  func.func @transform_4(%arg0: i32) -> (i32, i32) {
    %c0_i32 = arith.constant 0 : i32
    %c0_i32_0 = arith.constant 0 : i32
    return %arg0, %c0_i32 : i32, i32
  }
  func.func @transform_5(%arg0: i32) -> (i32, i32) {
    %c0_i32 = arith.constant 0 : i32
    %c0_i32_0 = arith.constant 0 : i32
    return %arg0, %c0_i32 : i32, i32
  }
}

</mosaic_0001>

<llo_original>
// kernel: tpu_custom_call.1
$region0: #{tpu_custom_call.1}
  #allocation0 [shape = 'u32[]', space=smem, size = 0x4, offset = 0x4, fixed_abs, tag = 'smem constant byte address 0x4 - core index']
  #allocation1 [shape = 'u32[144,128]{1,0:T(1,128)}', space=vmem, size = 0x12000, scoped, tag = 'internal scratch']
  %s0 = inlined_call_operand.hbm [shape: f32[8,256], index: 0, kind: input, shape index: {}]
  %s1 = inlined_call_operand.hbm [shape: f32[8,256], index: 1, kind: input, shape index: {}]
  %s2 = inlined_call_operand.hbm [shape: f32[8,128], index: 2, kind: input, shape index: {}]
  %s3 = inlined_call_operand.hbm [shape: f32[8,128], index: 3, kind: output, shape index: {0}]
  %s4 = inlined_call_operand.hbm [shape: f32[8,128], index: 4, kind: output, shape index: {1}]
  %s5 = inlined_call_operand.hbm [shape: f32[8,128], index: 5, kind: output, shape index: {2}]
  %6 = xla_tuple %s3, %s4, %s5
  %s7 = sld [smem:[#allocation0]]
  $region50: #{tpu_custom_call.1} parent=0
    _
  %s9 = ssub.s32 1, %s7
  %s10 = scalar_select 0, %s9, %s7
  $region1: #{tpu_custom_call.1} parent=0
    #allocation2 [shape = 'u8[4096]{0}', space=vmem, size = 0x1000, scoped, tag = 'input window, operand 0, single buffered']
    #allocation3 [shape = 's32[1]{0}', space=sflag, size = 0x4, scoped, tag = 'scoped memory for tpu_custom_call.1']
    #allocation4 [shape = 's32[1]{0}', space=sflag, size = 0x4, scoped, tag = 'scoped memory for tpu_custom_call.1']
    #allocation5 [shape = 'u8[4096]{0}', space=vmem, size = 0x1000, scoped, tag = 'input window, operand 1, single buffered']
    #allocation6 [shape = 's32[1]{0}', space=sflag, size = 0x4, scoped, tag = 'scoped memory for tpu_custom_call.1']
    #allocation7 [shape = 'u8[4096]{0}', space=vmem, size = 0x1000, scoped, tag = 'input window, operand 2, single buffered']
    #allocation8 [shape = 'u8[4096]{0}', space=vmem, size = 0x1000, scoped, tag = 'output window, operand 0, single buffered']
    #allocation9 [shape = 'u8[4096]{0}', space=vmem, size = 0x1000, scoped, tag = 'output window, operand 1, single buffered']
    #allocation10 [shape = 's32[1]{0}', space=sflag, size = 0x4, scoped, tag = 'scoped memory for tpu_custom_call.1']
    #allocation11 [shape = 'u8[4096]{0}', space=vmem, size = 0x1000, scoped, tag = 'output window, operand 2, single buffered']
    %11 = vsyncpa [#allocation3], 0
    %12 = vsyncpa [#allocation6], 0
    %13 = vsyncpa [#allocation4], 0
    %14 = vsyncpa [#allocation10], 0
    // Predicated region
    $region2: #{tpu_custom_call.1} parent=1 // pred_check
      _
    $region3: #{tpu_custom_call.1} parent=1 // pred_check_branch
      %16 = sbr.rel (0) target = $region5
    $region4: #{tpu_custom_call.1} parent=1 // pred_region
      %s18 = ssub.s32 128, 128
      %19 = vsyncadd [#allocation3], %s18
      %s21 = sshll.u32 [#allocation2], 4
      %s22 = int_to_ptr.vmem [resolvable:$true] %s21
      %24 = dma.hbm_to_vmem [thread:$0]  %s0, 128, %s22, [#allocation3]
    $region5: #{tpu_custom_call.1} parent=1 // pred_fallthru
      _
    // Predicated region
    $region6: #{tpu_custom_call.1} parent=1 // pred_check
      _
    $region7: #{tpu_custom_call.1} parent=1 // pred_check_branch
      %26 = sbr.rel (0) target = $region9
    $region8: #{tpu_custom_call.1} parent=1 // pred_region
      %s28 = ssub.s32 128, 128
      %29 = vsyncadd [#allocation6], %s28
      %s30 = scalar_lea.hbm %s1, 128
      %s32 = sshll.u32 [#allocation5], 4
      %s33 = int_to_ptr.vmem [resolvable:$true] %s32
      %35 = dma.hbm_to_vmem [thread:$0]  %s30, 128, %s33, [#allocation6]
    $region9: #{tpu_custom_call.1} parent=1 // pred_fallthru
      _
    // Predicated region
    $region10: #{tpu_custom_call.1} parent=1 // pred_check
      _
    $region11: #{tpu_custom_call.1} parent=1 // pred_check_branch
      %37 = sbr.rel (0) target = $region13
    $region12: #{tpu_custom_call.1} parent=1 // pred_region
      %s39 = ssub.s32 128, 128
      %40 = vsyncadd [#allocation6], %s39
      %s42 = sshll.u32 [#allocation7], 4
      %s43 = int_to_ptr.vmem [resolvable:$true] %s42
      %45 = dma.hbm_to_vmem [thread:$0]  %s2, 128, %s43, [#allocation6]
    $region13: #{tpu_custom_call.1} parent=1 // pred_fallthru
      _
    // Predicated region
    $region14: #{tpu_custom_call.1} parent=1 // pred_check
      _
    $region15: #{tpu_custom_call.1} parent=1 // pred_check_branch
      %47 = sbr.rel (0) target = $region17
    $region16: #{tpu_custom_call.1} parent=1 // pred_region
      %48 = dma.done [#allocation3], 128
    $region17: #{tpu_custom_call.1} parent=1 // pred_fallthru
      _
    // Predicated region
    $region18: #{tpu_custom_call.1} parent=1 // pred_check
      _
    $region19: #{tpu_custom_call.1} parent=1 // pred_check_branch
      %50 = sbr.rel (0) target = $region21
    $region20: #{tpu_custom_call.1} parent=1 // pred_region
      %51 = dma.done [#allocation6], 128
    $region21: #{tpu_custom_call.1} parent=1 // pred_fallthru
      _
    // Predicated region
    $region22: #{tpu_custom_call.1} parent=1 // pred_check
      _
    $region23: #{tpu_custom_call.1} parent=1 // pred_check_branch
      %53 = sbr.rel (0) target = $region25
    $region24: #{tpu_custom_call.1} parent=1 // pred_region
      %54 = dma.done [#allocation6], 128
    $region25: #{tpu_custom_call.1} parent=1 // pred_fallthru
      _
    %v55 = vld [vmem:[#allocation2] sm:$0xff]
    %v56 = vld [vmem:[#allocation5] sm:$0xff]
    %v57 = vsub.f32 %v56, 5.0
    %v58 = vmax.f32 %v57, 0.0
    %v59 = vand.u32 2147483647, %v57
    %v60 = vsub.f32 0.0, %v59
    %v61 = vmul.f32 %v60, 1.442695
    %v62 = vpow.pop %v61
    %v63 = vadd.f32 %v62, 1.0
    %v64 = vlog2.pop %v63
    %v65 = vmul.f32 %v64, 0.6931472
    %v66 = vmul.f32 -0.5, %v62
    %v67 = vadd.f32 %v66, 1.0
    %v68 = vmul.f32 %v67, %v62
    %v69 = vand.u32 2147483647, %v62
    %vm70 = vcmp.lt.f32.partialorder %v69, 0.0004427343
    %v71 = vsel %vm70, %v68, %v65
    %v72 = vadd.f32 %v58, %v71
    %73 = vst [vmem:[#allocation8] sm:$0xff] %v55
    %74 = vst [vmem:[#allocation9] sm:$0xff] %v72
    %v75 = vld [vmem:[#allocation7] sm:$0xff]
    %v76 = vmul.f32 %v75, %v72
    %v77 = vadd.f32 %v55, %v76
    %78 = vst [vmem:[#allocation11] sm:$0xff] %v77
    // Predicated region
    $region26: #{tpu_custom_call.1} parent=1 // pred_check
      _
    $region27: #{tpu_custom_call.1} parent=1 // pred_check_branch
      %80 = sbr.rel (0) target = $region29
    $region28: #{tpu_custom_call.1} parent=1 // pred_region
      %s82 = ssub.s32 128, 128
      %83 = vsyncadd [#allocation4], %s82
      %s85 = sshll.u32 [#allocation8], 4
      %s86 = int_to_ptr.vmem [resolvable:$true] %s85
      %88 = dma.vmem_to_hbm [thread:$0]  %s86, 128, %s3, [#allocation4]
    $region29: #{tpu_custom_call.1} parent=1 // pred_fallthru
      _
    // Predicated region
    $region30: #{tpu_custom_call.1} parent=1 // pred_check
      _
    $region31: #{tpu_custom_call.1} parent=1 // pred_check_branch
      %90 = sbr.rel (0) target = $region33
    $region32: #{tpu_custom_call.1} parent=1 // pred_region
      %s92 = ssub.s32 128, 128
      %93 = vsyncadd [#allocation10], %s92
      %s95 = sshll.u32 [#allocation9], 4
      %s96 = int_to_ptr.vmem [resolvable:$true] %s95
      %98 = dma.vmem_to_hbm [thread:$0]  %s96, 128, %s4, [#allocation10]
    $region33: #{tpu_custom_call.1} parent=1 // pred_fallthru
      _
    // Predicated region
    $region34: #{tpu_custom_call.1} parent=1 // pred_check
      _
    $region35: #{tpu_custom_call.1} parent=1 // pred_check_branch
      %100 = sbr.rel (0) target = $region37
    $region36: #{tpu_custom_call.1} parent=1 // pred_region
      %s102 = ssub.s32 128, 128
      %103 = vsyncadd [#allocation10], %s102
      %s105 = sshll.u32 [#allocation11], 4
      %s106 = int_to_ptr.vmem [resolvable:$true] %s105
      %108 = dma.vmem_to_hbm [thread:$0]  %s106, 128, %s5, [#allocation10]
    $region37: #{tpu_custom_call.1} parent=1 // pred_fallthru
      _
    // Predicated region
    $region38: #{tpu_custom_call.1} parent=1 // pred_check
      _
    $region39: #{tpu_custom_call.1} parent=1 // pred_check_branch
      %110 = sbr.rel (0) target = $region41
    $region40: #{tpu_custom_call.1} parent=1 // pred_region
      %111 = dma.done [#allocation4], 128
    $region41: #{tpu_custom_call.1} parent=1 // pred_fallthru
      _
    // Predicated region
    $region42: #{tpu_custom_call.1} parent=1 // pred_check
      _
    $region43: #{tpu_custom_call.1} parent=1 // pred_check_branch
      %113 = sbr.rel (0) target = $region45
    $region44: #{tpu_custom_call.1} parent=1 // pred_region
      %114 = dma.done [#allocation10], 128
    $region45: #{tpu_custom_call.1} parent=1 // pred_fallthru
      _
    // Predicated region
    $region46: #{tpu_custom_call.1} parent=1 // pred_check
      _
    $region47: #{tpu_custom_call.1} parent=1 // pred_check_branch
      %116 = sbr.rel (0) target = $region49
    $region48: #{tpu_custom_call.1} parent=1 // pred_region
      %117 = dma.done [#allocation10], 128
    $region49: #{tpu_custom_call.1} parent=1 // pred_fallthru
      _
    %118 = vsyncpa [#allocation3], 1
    %119 = vsyncpa [#allocation6], 1
    %120 = vsyncpa [#allocation4], 1
    %121 = vsyncpa [#allocation10], 1

</llo_original>
